<compile_context>
chip_gen: v7x
topology: tpu7x:2x2x1
jax: 0.10.0
libtpu: 0.0.40
codegen_flags: <defaults>
</compile_context>

<pallas_src>
import jax
import jax.numpy as jnp
from jax.experimental import pallas as pl
from jax.experimental.pallas import tpu as pltpu

IN_DIM = 9        # fallback input_dim
HID_DIM = 64      # fallback hidden_dim
OUT_DIM = 6       # fallback output_dim
OUT_PAD_T = 8     # sublane-padded output features for the transposed store
TB_ALIGN = 128    # lane alignment for the (OUT_PAD_T, TB) output blocks


def _round_up(x, m):
    return ((x + m - 1) // m) * m


def _max_batch_tile():
    """Generation-aware batch-tile cap.

    8192 rows/tile on 128 MiB-VMEM parts (v5e/v6e), 4096 on 64 MiB parts
    (v7x). Per-tile footprint is dominated by the lane-padded x tile
    (TB*128*4 B, double-buffered), so both choices stay well under budget.
    """
    try:
        vmem = int(pltpu.get_tpu_info().vmem_capacity_bytes)
    except Exception:
        vmem = 64 << 20
    return 8192 if vmem >= (128 << 20) else 4096


def init_k1_params(key):
    """Deterministic synthetic parameters for the fallback K1 network."""
    k1, k2, k3 = jax.random.split(key, 3)
    w1 = jax.random.normal(k1, (IN_DIM, HID_DIM), jnp.float32) * 0.1
    b1 = jnp.zeros((HID_DIM,), jnp.float32)
    w2 = jax.random.normal(k2, (HID_DIM, HID_DIM), jnp.float32) * 0.1
    b2 = jnp.zeros((HID_DIM,), jnp.float32)
    w3 = jax.random.normal(k3, (HID_DIM, OUT_DIM), jnp.float32) * 0.1
    b3 = jnp.zeros((OUT_DIM,), jnp.float32)
    return (w1, b1, w2, b2, w3, b3)


def k1_integrated_forward(consciousness_input, params):
    """Replicates K1IntegratedEmbodiedPraxis.forward (first call, fresh state)."""
    B, D = consciousness_input.shape
    assert D == IN_DIM, f"expected input dim {IN_DIM}, got {D}"

    # ---- tiling: big tiles, but >=2 tiles for large B (v7x megacore) --------
    MAX_TB = _max_batch_tile()
    half = _round_up(-(-B // 2), TB_ALIGN)          # ceil(B/2), 128-aligned
    TB = min(MAX_TB, max(TB_ALIGN, half))           # multiple of 128 always
    B_pad = _round_up(B, TB)
    num_tiles = B_pad // TB

    x = consciousness_input.astype(jnp.float32)
    if B_pad != B:
        x = jnp.pad(x, ((0, B_pad - B), (0, 0)))

    # ---- parameter prep ------------------------------------------------------
    w1, b1, w2, b2, w3, b3 = params
    w1f = w1.astype(jnp.float32)                    # K=9 encoder matmul stays f32
    b1r = jnp.reshape(b1, (1, HID_DIM)).astype(jnp.float32)
    w2b = w2.astype(jnp.bfloat16)                   # bf16 MXU, f32 accumulation
    b2r = jnp.reshape(b2, (1, HID_DIM)).astype(jnp.float32)
    # transposed, sublane-padded final layer: (8, 64) bf16 weights, (8, 1) f32 bias
    w3t = jnp.zeros((OUT_PAD_T, HID_DIM), jnp.float32).at[:OUT_DIM, :].set(
        jnp.transpose(w3.astype(jnp.float32))).astype(jnp.bfloat16)
    b3t = jnp.zeros((OUT_PAD_T, 1), jnp.float32).at[:OUT_DIM, 0].set(
        b3.astype(jnp.float32))

    # ---- kernel (closes over static B / TB for the padded-row masks) --------
    def k1_praxis_kernel(x_ref, w1_ref, b1_ref, w2_ref, b2_ref, w3t_ref, b3t_ref,
                         out_ref, stats_ref):
        xv = x_ref[...]                                            # (TB, 9) f32

        # consciousness_encoder: Linear(9 -> 64) + ReLU  (f32; odd K=9)
        h1 = jnp.dot(xv, w1_ref[...], preferred_element_type=jnp.float32)
        h1 = jnp.maximum(h1 + b1_ref[...], 0.0)

        # action_decoder[0..1]: Linear(64 -> 64) + ReLU  (bf16 operands, f32 acc)
        h2 = jnp.dot(h1.astype(jnp.bfloat16), w2_ref[...],
                     preferred_element_type=jnp.float32)
        h2 = jnp.maximum(h2 + b2_ref[...], 0.0)

        # action_decoder[2]: Linear(64 -> 6) emitted TRANSPOSED as (8, TB):
        # one XLU transpose of h2 (XLU is idle here) buys an unmasked,
        # lane-dense output store that is ~16x smaller than a (TB, 128) slab.
        h2t = jnp.transpose(h2).astype(jnp.bfloat16)               # (64, TB)
        yt = jnp.dot(w3t_ref[...], h2t, preferred_element_type=jnp.float32)
        yt = yt + b3t_ref[...]                                     # (8, TB) f32
        out_ref[...] = yt.astype(out_ref.dtype)

        # Per-tile partial reductions (mask out batch-padded rows/columns).
        base = pl.program_id(0) * TB
        rows = base + jax.lax.broadcasted_iota(jnp.int32, (TB, 1), 0)
        xm = xv * (rows < B).astype(jnp.float32)
        cols = base + jax.lax.broadcasted_iota(jnp.int32, (1, TB), 1)
        ym = yt * (cols < B).astype(jnp.float32)    # padded feature rows are 0
        sum_x = jnp.sum(xm)
        sumsq_x = jnp.sum(xm * xm)
        sumsq_y = jnp.sum(ym * ym)

        lane = jax.lax.broadcasted_iota(jnp.int32, (8, 128), 1)
        stats = jnp.where(lane == 0, sum_x,
                jnp.where(lane == 1, sumsq_x,
                jnp.where(lane == 2, sumsq_y, 0.0)))
        stats_ref[...] = stats[None].astype(stats_ref.dtype)

    # ---- pallas_call: batch grid, resident weights, lane-dense outputs ------
    grid_spec = pltpu.PrefetchScalarGridSpec(
        num_scalar_prefetch=0,
        grid=(num_tiles,),
        in_specs=[
            pl.BlockSpec((TB, IN_DIM), lambda i: (i, 0)),          # x tile
            pl.BlockSpec((IN_DIM, HID_DIM), lambda i: (0, 0)),     # w1 resident
            pl.BlockSpec((1, HID_DIM), lambda i: (0, 0)),          # b1 resident
            pl.BlockSpec((HID_DIM, HID_DIM), lambda i: (0, 0)),    # w2 resident
            pl.BlockSpec((1, HID_DIM), lambda i: (0, 0)),          # b2 resident
            pl.BlockSpec((OUT_PAD_T, HID_DIM), lambda i: (0, 0)),  # w3^T resident
            pl.BlockSpec((OUT_PAD_T, 1), lambda i: (0, 0)),        # b3^T resident
        ],
        out_specs=(
            pl.BlockSpec((OUT_PAD_T, TB), lambda i: (0, i)),       # y^T tiles
            pl.BlockSpec((1, 8, 128), lambda i: (i, 0, 0)),        # stats partials
        ),
    )

    flops = 2 * B_pad * (IN_DIM * HID_DIM + HID_DIM * HID_DIM
                         + HID_DIM * OUT_PAD_T)
    bytes_accessed = (
        B_pad * IN_DIM * 4                                  # x read (f32)
        + (IN_DIM * HID_DIM + HID_DIM) * 4                  # w1/b1 (f32)
        + HID_DIM * HID_DIM * 2 + HID_DIM * 4               # w2 (bf16) / b2
        + OUT_PAD_T * HID_DIM * 2 + OUT_PAD_T * 4           # w3^T (bf16) / b3^T
        + OUT_PAD_T * B_pad * 4                             # transposed output
        + num_tiles * 8 * 128 * 4                           # stats partials
    )

    # Size VMEM request to the real double-buffered footprint + headroom;
    # never request all of v7x's physical 64 MiB.
    vmem_limit = (32 << 20) if TB <= 4096 else (48 << 20)

    out_t, stats_tiles = pl.pallas_call(
        k1_praxis_kernel,
        out_shape=(
            jax.ShapeDtypeStruct((OUT_PAD_T, B_pad), jnp.float32),
            jax.ShapeDtypeStruct((num_tiles, 8, 128), jnp.float32),
        ),
        grid_spec=grid_spec,
        compiler_params=pltpu.CompilerParams(
            dimension_semantics=("parallel",),
            vmem_limit_bytes=vmem_limit,
        ),
        cost_estimate=pl.CostEstimate(
            flops=flops, transcendentals=0, bytes_accessed=bytes_accessed),
    )(x, w1f, b1r, w2b, b2r, w3t, b3t)

    k1_output = jnp.transpose(out_t[:OUT_DIM, :B])          # (B, 6)

    # Finish the reductions on the per-tile partials (tiny, fused by XLA).
    partials = jnp.sum(stats_tiles[:, 0, :3], axis=0)       # (3,)
    input_magnitude = jnp.sqrt(partials[1])                  # ||x||_F
    consciousness_level = partials[0] / float(B * IN_DIM)    # mean(x)
    output_magnitude = jnp.sqrt(partials[2])                 # ||k1_output||_F

    # _update_embodied_position: two 'prediction' flows -> direction [1, 0].
    total_magnitude = input_magnitude + output_magnitude
    flow_vector = jnp.array([0.1, 0.0], jnp.float32) * total_magnitude
    pos0 = jnp.zeros((2,), jnp.float32)   # fresh current_embodied_position
    new_pos = jnp.where(
        total_magnitude > 0.0,
        jnp.clip(pos0 + flow_vector / total_magnitude, -5.0, 5.0),
        pos0,
    )

    # _calculate_local_tau_prime: 2 flows, single flow_type ('prediction').
    flow_complexity = (input_magnitude + output_magnitude) / 2.0
    flow_diversity = 1.0
    complexity_factor = 1.0 + flow_complexity * 0.3 + flow_diversity * 0.1
    consciousness_factor = 0.8 + consciousness_level * 0.4
    learning_factor = 1.0   # no recent learning events on first call
    local_tau_prime = jnp.clip(
        1.0 * complexity_factor * consciousness_factor * learning_factor, 0.3, 3.0
    )

    return {
        "k1_output": k1_output,
        "local_tau_prime": local_tau_prime,
        "embodied_position": new_pos,
        "data_flows": 2,   # return_data_flows=False -> len(data_flows)
    }


if __name__ == "__main__":
    key = jax.random.PRNGKey(0)
    k_x, k_p = jax.random.split(key)
    B = 2
    consciousness_input = jax.random.normal(k_x, (B, IN_DIM), jnp.float32)
    params = init_k1_params(k_p)

    result = k1_integrated_forward(consciousness_input, params)
    jax.block_until_ready(result)
    print("KERNEL_OK")
</pallas_src>

<mosaic_0001>
module attributes {stable_mosaic.version = 11 : i64} {
  func.func @k1_praxis_kernel(%arg0: i32, %arg1: memref<128x9xf32, #tpu.memory_space<vmem>>, %arg2: memref<9x64xf32, #tpu.memory_space<vmem>>, %arg3: memref<1x64xf32, #tpu.memory_space<vmem>>, %arg4: memref<64x64xbf16, #tpu.memory_space<vmem>>, %arg5: memref<1x64xf32, #tpu.memory_space<vmem>>, %arg6: memref<8x64xbf16, #tpu.memory_space<vmem>>, %arg7: memref<8x1xf32, #tpu.memory_space<vmem>>, %arg8: memref<8x128xf32, #tpu.memory_space<vmem>>, %arg9: memref<1x8x128xf32, #tpu.memory_space<vmem>>) attributes {dimension_semantics = [#tpu.dimension_semantics<parallel>], iteration_bounds = array<i64: 1>, scalar_prefetch = 0 : i64, scratch_operands = 0 : i64, tpu.core_type = #tpu.core_type<tc>, window_params = [{transform_indices = @transform_0, window_bounds = array<i64: 128, 9>}, {pipeline_mode = #tpu.pipeline_mode<synchronous>, transform_indices = @transform_1, window_bounds = array<i64: 9, 64>}, {pipeline_mode = #tpu.pipeline_mode<synchronous>, transform_indices = @transform_2, window_bounds = array<i64: 1, 64>}, {pipeline_mode = #tpu.pipeline_mode<synchronous>, transform_indices = @transform_3, window_bounds = array<i64: 64, 64>}, {pipeline_mode = #tpu.pipeline_mode<synchronous>, transform_indices = @transform_4, window_bounds = array<i64: 1, 64>}, {pipeline_mode = #tpu.pipeline_mode<synchronous>, transform_indices = @transform_5, window_bounds = array<i64: 8, 64>}, {pipeline_mode = #tpu.pipeline_mode<synchronous>, transform_indices = @transform_6, window_bounds = array<i64: 8, 1>}, {transform_indices = @transform_7, window_bounds = array<i64: 8, 128>}, {transform_indices = @transform_8, window_bounds = array<i64: 1, 8, 128>}]} {
    %c0 = arith.constant 0 : index
    %c0_0 = arith.constant 0 : index
    %0 = vector.load %arg1[%c0, %c0_0] : memref<128x9xf32, #tpu.memory_space<vmem>>, vector<128x9xf32>
    %c0_1 = arith.constant 0 : index
    %c0_2 = arith.constant 0 : index
    %1 = vector.load %arg2[%c0_1, %c0_2] : memref<9x64xf32, #tpu.memory_space<vmem>>, vector<9x64xf32>
    %cst = arith.constant dense<0.000000e+00> : vector<128x64xf32>
    %2 = tpu.matmul %0, %1, %cst {dimension_numbers = #tpu.dot_dimension_numbers<[1], [0], [0], [1], [0, 0, 1, 1], [], []>} : vector<128x9xf32>, vector<9x64xf32>, vector<128x64xf32> -> vector<128x64xf32>
    %c0_3 = arith.constant 0 : index
    %c0_4 = arith.constant 0 : index
    %3 = vector.load %arg3[%c0_3, %c0_4] : memref<1x64xf32, #tpu.memory_space<vmem>>, vector<1x64xf32>
    %4 = vector.broadcast %3 : vector<1x64xf32> to vector<128x64xf32>
    %5 = arith.addf %2, %4 : vector<128x64xf32>
    %cst_5 = arith.constant 0.000000e+00 : f32
    %6 = vector.broadcast %cst_5 : f32 to vector<128x64xf32>
    %7 = arith.maximumf %5, %6 : vector<128x64xf32>
    %8 = arith.truncf %7 : vector<128x64xf32> to vector<128x64xbf16>
    %c0_6 = arith.constant 0 : index
    %c0_7 = arith.constant 0 : index
    %9 = vector.load %arg4[%c0_6, %c0_7] : memref<64x64xbf16, #tpu.memory_space<vmem>>, vector<64x64xbf16>
    %cst_8 = arith.constant dense<0.000000e+00> : vector<128x64xf32>
    %10 = tpu.matmul %8, %9, %cst_8 {dimension_numbers = #tpu.dot_dimension_numbers<[1], [0], [0], [1], [0, 0, 1, 1], [], []>} : vector<128x64xbf16>, vector<64x64xbf16>, vector<128x64xf32> -> vector<128x64xf32>
    %c0_9 = arith.constant 0 : index
    %c0_10 = arith.constant 0 : index
    %11 = vector.load %arg5[%c0_9, %c0_10] : memref<1x64xf32, #tpu.memory_space<vmem>>, vector<1x64xf32>
    %12 = vector.broadcast %11 : vector<1x64xf32> to vector<128x64xf32>
    %13 = arith.addf %10, %12 : vector<128x64xf32>
    %cst_11 = arith.constant 0.000000e+00 : f32
    %14 = vector.broadcast %cst_11 : f32 to vector<128x64xf32>
    %15 = arith.maximumf %13, %14 : vector<128x64xf32>
    %16 = tpu.transpose %15, [1, 0] : vector<128x64xf32> -> vector<64x128xf32>
    %17 = arith.truncf %16 : vector<64x128xf32> to vector<64x128xbf16>
    %c0_12 = arith.constant 0 : index
    %c0_13 = arith.constant 0 : index
    %18 = vector.load %arg6[%c0_12, %c0_13] : memref<8x64xbf16, #tpu.memory_space<vmem>>, vector<8x64xbf16>
    %cst_14 = arith.constant dense<0.000000e+00> : vector<8x128xf32>
    %19 = tpu.matmul %18, %17, %cst_14 {dimension_numbers = #tpu.dot_dimension_numbers<[1], [0], [0], [1], [0, 0, 1, 1], [], []>} : vector<8x64xbf16>, vector<64x128xbf16>, vector<8x128xf32> -> vector<8x128xf32>
    %c0_15 = arith.constant 0 : index
    %c0_16 = arith.constant 0 : index
    %20 = vector.load %arg7[%c0_15, %c0_16] : memref<8x1xf32, #tpu.memory_space<vmem>>, vector<8x1xf32>
    %21 = vector.broadcast %20 : vector<8x1xf32> to vector<8x128xf32>
    %22 = arith.addf %19, %21 : vector<8x128xf32>
    %c0_17 = arith.constant 0 : index
    %c0_18 = arith.constant 0 : index
    %23 = vector.load %arg8[%c0_17, %c0_18] : memref<8x128xf32, #tpu.memory_space<vmem>>, vector<8x128xf32>
    tpu.vector_store %arg8[%c0_17, %c0_18], %22 {strides = array<i32>} : memref<8x128xf32, #tpu.memory_space<vmem>>, vector<8x128xf32>,
    %c128_i32 = arith.constant 128 : i32
    %24 = arith.muli %arg0, %c128_i32 : i32
    %25 = tpu.iota {dimensions = array<i32: 0>} : vector<128x1xi32>
    %26 = vector.broadcast %24 : i32 to vector<128x1xi32>
    %27 = arith.addi %26, %25 : vector<128x1xi32>
    %c2_i32 = arith.constant 2 : i32
    %28 = vector.broadcast %c2_i32 : i32 to vector<128x1xi32>
    %29 = arith.cmpi slt, %27, %28 : vector<128x1xi32>
    %30 = arith.extui %29 : vector<128x1xi1> to vector<128x1xi32>
    %31 = arith.sitofp %30 : vector<128x1xi32> to vector<128x1xf32>
    %32 = vector.broadcast %31 : vector<128x1xf32> to vector<128x9xf32>
    %33 = arith.mulf %0, %32 : vector<128x9xf32>
    %34 = tpu.iota {dimensions = array<i32: 1>} : vector<1x128xi32>
    %35 = vector.broadcast %24 : i32 to vector<1x128xi32>
    %36 = arith.addi %35, %34 : vector<1x128xi32>
    %c2_i32_19 = arith.constant 2 : i32
    %37 = vector.broadcast %c2_i32_19 : i32 to vector<1x128xi32>
    %38 = arith.cmpi slt, %36, %37 : vector<1x128xi32>
    %39 = arith.extui %38 : vector<1x128xi1> to vector<1x128xi32>
    %40 = arith.sitofp %39 : vector<1x128xi32> to vector<1x128xf32>
    %41 = vector.broadcast %40 : vector<1x128xf32> to vector<8x128xf32>
    %42 = arith.mulf %22, %41 : vector<8x128xf32>
    %43 = vector.shape_cast %33 : vector<128x9xf32> to vector<1x128x9xf32>
    %cst_20 = arith.constant dense<0.000000e+00> : vector<1xf32>
    %44 = vector.multi_reduction <add>, %43, %cst_20 [1, 2] : vector<1x128x9xf32> to vector<1xf32>
    %45 = vector.shape_cast %44 : vector<1xf32> to vector<1x1x1xf32>
    %46 = vector.extract %45[0, 0, 0] : f32 from vector<1x1x1xf32>
    %47 = arith.mulf %33, %33 : vector<128x9xf32>
    %48 = vector.shape_cast %47 : vector<128x9xf32> to vector<1x128x9xf32>
    %cst_21 = arith.constant dense<0.000000e+00> : vector<1xf32>
    %49 = vector.multi_reduction <add>, %48, %cst_21 [1, 2] : vector<1x128x9xf32> to vector<1xf32>
    %50 = vector.shape_cast %49 : vector<1xf32> to vector<1x1x1xf32>
    %51 = vector.extract %50[0, 0, 0] : f32 from vector<1x1x1xf32>
    %52 = arith.mulf %42, %42 : vector<8x128xf32>
    %53 = vector.shape_cast %52 : vector<8x128xf32> to vector<1x8x128xf32>
    %cst_22 = arith.constant dense<0.000000e+00> : vector<1xf32>
    %54 = vector.multi_reduction <add>, %53, %cst_22 [1, 2] : vector<1x8x128xf32> to vector<1xf32>
    %55 = vector.shape_cast %54 : vector<1xf32> to vector<1x1x1xf32>
    %56 = vector.extract %55[0, 0, 0] : f32 from vector<1x1x1xf32>
    %57 = tpu.iota {dimensions = array<i32: 1>} : vector<8x128xi32>
    %c0_i32 = arith.constant 0 : i32
    %58 = vector.broadcast %c0_i32 : i32 to vector<8x128xi32>
    %59 = arith.cmpi eq, %57, %58 : vector<8x128xi32>
    %c1_i32 = arith.constant 1 : i32
    %60 = vector.broadcast %c1_i32 : i32 to vector<8x128xi32>
    %61 = arith.cmpi eq, %57, %60 : vector<8x128xi32>
    %c2_i32_23 = arith.constant 2 : i32
    %62 = vector.broadcast %c2_i32_23 : i32 to vector<8x128xi32>
    %63 = arith.cmpi eq, %57, %62 : vector<8x128xi32>
    %cst_24 = arith.constant 0.000000e+00 : f32
    %64 = vector.broadcast %56 : f32 to vector<8x128xf32>
    %65 = vector.broadcast %cst_24 : f32 to vector<8x128xf32>
    %66 = arith.select %63, %64, %65 : vector<8x128xi1>, vector<8x128xf32>
    %67 = vector.broadcast %51 : f32 to vector<8x128xf32>
    %68 = arith.select %61, %67, %66 : vector<8x128xi1>, vector<8x128xf32>
    %69 = vector.broadcast %46 : f32 to vector<8x128xf32>
    %70 = arith.select %59, %69, %68 : vector<8x128xi1>, vector<8x128xf32>
    %71 = vector.shape_cast %70 : vector<8x128xf32> to vector<1x8x128xf32>
    %c0_25 = arith.constant 0 : index
    %c0_26 = arith.constant 0 : index
    %c0_27 = arith.constant 0 : index
    %72 = vector.load %arg9[%c0_25, %c0_26, %c0_27] : memref<1x8x128xf32, #tpu.memory_space<vmem>>, vector<1x8x128xf32>
    tpu.vector_store %arg9[%c0_25, %c0_26, %c0_27], %71 {strides = array<i32>} : memref<1x8x128xf32, #tpu.memory_space<vmem>>, vector<1x8x128xf32>,
    return
  }
  func.func @transform_0(%arg0: i32) -> (i32, i32) {
    %c0_i32 = arith.constant 0 : i32
    %c0_i32_0 = arith.constant 0 : i32
    return %arg0, %c0_i32 : i32, i32
  }
  func.func @transform_1(%arg0: i32) -> (i32, i32) {
    %c0_i32 = arith.constant 0 : i32
    %c0_i32_0 = arith.constant 0 : i32
    %c0_i32_1 = arith.constant 0 : i32
    return %c0_i32, %c0_i32_0 : i32, i32
  }
  func.func @transform_2(%arg0: i32) -> (i32, i32) {
    %c0_i32 = arith.constant 0 : i32
    %c0_i32_0 = arith.constant 0 : i32
    %c0_i32_1 = arith.constant 0 : i32
    return %c0_i32, %c0_i32_0 : i32, i32
  }
  func.func @transform_3(%arg0: i32) -> (i32, i32) {
    %c0_i32 = arith.constant 0 : i32
    %c0_i32_0 = arith.constant 0 : i32
    %c0_i32_1 = arith.constant 0 : i32
    return %c0_i32, %c0_i32_0 : i32, i32
  }
  func.func @transform_4(%arg0: i32) -> (i32, i32) {
    %c0_i32 = arith.constant 0 : i32
    %c0_i32_0 = arith.constant 0 : i32
    %c0_i32_1 = arith.constant 0 : i32
    return %c0_i32, %c0_i32_0 : i32, i32
  }
  func.func @transform_5(%arg0: i32) -> (i32, i32) {
    %c0_i32 = arith.constant 0 : i32
    %c0_i32_0 = arith.constant 0 : i32
    %c0_i32_1 = arith.constant 0 : i32
    return %c0_i32, %c0_i32_0 : i32, i32
  }
  func.func @transform_6(%arg0: i32) -> (i32, i32) {
    %c0_i32 = arith.constant 0 : i32
    %c0_i32_0 = arith.constant 0 : i32
    %c0_i32_1 = arith.constant 0 : i32
    return %c0_i32, %c0_i32_0 : i32, i32
  }
  func.func @transform_7(%arg0: i32) -> (i32, i32) {
    %c0_i32 = arith.constant 0 : i32
    %c0_i32_0 = arith.constant 0 : i32
    return %c0_i32, %arg0 : i32, i32
  }
  func.func @transform_8(%arg0: i32) -> (i32, i32, i32) {
    %c0_i32 = arith.constant 0 : i32
    %c0_i32_0 = arith.constant 0 : i32
    %c0_i32_1 = arith.constant 0 : i32
    return %arg0, %c0_i32, %c0_i32_0 : i32, i32, i32
  }
}

</mosaic_0001>

<llo_original>
// kernel: tpu_custom_call.1
$region0: #{tpu_custom_call.1}
  #allocation0 [shape = 'u32[]', space=smem, size = 0x4, offset = 0x4, fixed_abs, tag = 'smem constant byte address 0x4 - core index']
  #allocation1 [shape = 'u32[144,128]{1,0:T(1,128)}', space=vmem, size = 0x12000, scoped, tag = 'internal scratch']
  %s0 = inlined_call_operand.vmem [shape: f32[128,9], index: 0, kind: input, shape index: {}]
  %s1 = inlined_call_operand.vmem [shape: f32[9,64], index: 1, kind: input, shape index: {}]
  %s2 = inlined_call_operand.vmem [shape: f32[1,64], index: 2, kind: input, shape index: {}]
  %s3 = inlined_call_operand.vmem [shape: bf16[64,64], index: 3, kind: input, shape index: {}]
  %s4 = inlined_call_operand.vmem [shape: f32[1,64], index: 4, kind: input, shape index: {}]
  %s5 = inlined_call_operand.vmem [shape: bf16[8,64], index: 5, kind: input, shape index: {}]
  %s6 = inlined_call_operand.vmem [shape: f32[8,1], index: 6, kind: input, shape index: {}]
  %s7 = inlined_call_operand.hbm [shape: f32[8,128], index: 7, kind: output, shape index: {0}]
  %s8 = inlined_call_operand.hbm [shape: f32[1,8,128], index: 8, kind: output, shape index: {1}]
  %9 = xla_tuple %s7, %s8
  %s10 = sld [smem:[#allocation0]]
  $region46: #{tpu_custom_call.1} parent=0
    _
  %s12 = ssub.s32 1, %s10
  %s13 = scalar_select 0, %s12, %s10
  $region1: #{tpu_custom_call.1} parent=0
    #allocation2 [shape = 'u8[4096]{0}', space=vmem, size = 0x1000, scoped, tag = 'output window, operand 0, single buffered']
    #allocation3 [shape = 's32[1]{0}', space=sflag, size = 0x4, scoped, tag = 'scoped memory for tpu_custom_call.1']
    #allocation4 [shape = 'u8[4096]{0}', space=vmem, size = 0x1000, scoped, tag = 'output window, operand 1, single buffered']
    #allocation5 [shape = 's32[1]{0}', space=sflag, size = 0x4, scoped, tag = 'scoped memory for tpu_custom_call.1']
    %14 = vsyncpa [#allocation3], 0
    %15 = vsyncpa [#allocation5], 0
    // Predicated region
    $region2: #{tpu_custom_call.1} parent=1 // pred_check
      _
    $region3: #{tpu_custom_call.1} parent=1 // pred_check_branch
      %17 = sbr.rel (0) target = $region5
    $region4: #{tpu_custom_call.1} parent=1 // pred_region
      _
    $region5: #{tpu_custom_call.1} parent=1 // pred_fallthru
      _
    // Predicated region
    $region6: #{tpu_custom_call.1} parent=1 // pred_check
      _
    $region7: #{tpu_custom_call.1} parent=1 // pred_check_branch
      %19 = sbr.rel (0) target = $region9
    $region8: #{tpu_custom_call.1} parent=1 // pred_region
      _
    $region9: #{tpu_custom_call.1} parent=1 // pred_fallthru
      _
    // Predicated region
    $region10: #{tpu_custom_call.1} parent=1 // pred_check
      _
    $region11: #{tpu_custom_call.1} parent=1 // pred_check_branch
      %21 = sbr.rel (0) target = $region13
    $region12: #{tpu_custom_call.1} parent=1 // pred_region
      _
    $region13: #{tpu_custom_call.1} parent=1 // pred_fallthru
      _
    // Predicated region
    $region14: #{tpu_custom_call.1} parent=1 // pred_check
      _
    $region15: #{tpu_custom_call.1} parent=1 // pred_check_branch
      %23 = sbr.rel (0) target = $region17
    $region16: #{tpu_custom_call.1} parent=1 // pred_region
      _
    $region17: #{tpu_custom_call.1} parent=1 // pred_fallthru
      _
    // Predicated region
    $region18: #{tpu_custom_call.1} parent=1 // pred_check
      _
    $region19: #{tpu_custom_call.1} parent=1 // pred_check_branch
      %25 = sbr.rel (0) target = $region21
    $region20: #{tpu_custom_call.1} parent=1 // pred_region
      _
    $region21: #{tpu_custom_call.1} parent=1 // pred_fallthru
      _
    // Predicated region
    $region22: #{tpu_custom_call.1} parent=1 // pred_check
      _
    $region23: #{tpu_custom_call.1} parent=1 // pred_check_branch
      %27 = sbr.rel (0) target = $region25
    $region24: #{tpu_custom_call.1} parent=1 // pred_region
      _
    $region25: #{tpu_custom_call.1} parent=1 // pred_fallthru
      _
    // Predicated region
    $region26: #{tpu_custom_call.1} parent=1 // pred_check
      _
    $region27: #{tpu_custom_call.1} parent=1 // pred_check_branch
      %29 = sbr.rel (0) target = $region29
    $region28: #{tpu_custom_call.1} parent=1 // pred_region
      _
    $region29: #{tpu_custom_call.1} parent=1 // pred_fallthru
      _
    %v31 = vld [vmem:[%s0] sm:$0xff]
    %v32 = vld [vmem:[%s0 + $0x8] sm:$0xff]
    %v33 = vld [vmem:[%s0 + $0x10] sm:$0xff]
    %v34 = vld [vmem:[%s0 + $0x18] sm:$0xff]
    %v35 = vld [vmem:[%s0 + $0x20] sm:$0xff]
    %v36 = vld [vmem:[%s0 + $0x28] sm:$0xff]
    %v37 = vld [vmem:[%s0 + $0x30] sm:$0xff]
    %v38 = vld [vmem:[%s0 + $0x38] sm:$0xff]
    %v39 = vld [vmem:[%s0 + $0x40] sm:$0xff]
    %v40 = vld [vmem:[%s0 + $0x48] sm:$0xff]
    %v41 = vld [vmem:[%s0 + $0x50] sm:$0xff]
    %v42 = vld [vmem:[%s0 + $0x58] sm:$0xff]
    %v43 = vld [vmem:[%s0 + $0x60] sm:$0xff]
    %v44 = vld [vmem:[%s0 + $0x68] sm:$0xff]
    %v45 = vld [vmem:[%s0 + $0x70] sm:$0xff]
    %v46 = vld [vmem:[%s0 + $0x78] sm:$0xff]
    %v47 = vld [vmem:[%s1] sm:$0xff]
    %v48 = vld [vmem:[%s1 + $0x8] sm:$0x1]
    %v49 = vld [vmem:[%s2] sm:$0x1]
    %v51 = vlaneseq
    %v52 = vshrl.u32 %v51, 7
    %v53 = vsub.s32 0, %v52
    %v54 = vrot.slane %v49, %v53
    %vm56 = vcmask 72704
    %v58 = vsel %vm56, %v31, 0
    %v61 = vsel %vm56, %v32, 0
    %v64 = vsel %vm56, %v33, 0
    %v67 = vsel %vm56, %v34, 0
    %v70 = vsel %vm56, %v35, 0
    %v73 = vsel %vm56, %v36, 0
    %v76 = vsel %vm56, %v37, 0
    %v79 = vsel %vm56, %v38, 0
    %v82 = vsel %vm56, %v39, 0
    %v85 = vsel %vm56, %v40, 0
    %v88 = vsel %vm56, %v41, 0
    %v91 = vsel %vm56, %v42, 0
    %v94 = vsel %vm56, %v43, 0
    %v97 = vsel %vm56, %v44, 0
    %v100 = vsel %vm56, %v45, 0
    %v103 = vsel %vm56, %v46, 0
    %vm105 = vcmask 1040384
    %v107 = vsel %vm105, %v48, 0
    %109 = vmatprep.subr.mxu0 0.0
    %110 = vmatpush1.msra.mxu0 %v47
    %111 = vmatprep.subr.mxu0 0.0
    %112 = vmatpush1.msra.mxu0 %v107
    %113 = vmatprep.subr.mxu0 0.0
    %114 = vmatpush1.msra.mxu0 0.0
    %115 = vmatprep.subr.mxu0 0.0
    %116 = vmatpush1.msra.mxu0 0.0
    %117 = vmatprep.subr.mxu0 0.0
    %118 = vmatpush1.msra.mxu0 0.0
    %119 = vmatprep.subr.mxu0 0.0
    %120 = vmatpush1.msra.mxu0 0.0
    %121 = vmatprep.subr.mxu0 0.0
    %122 = vmatpush1.msra.mxu0 0.0
    %123 = vmatprep.subr.mxu0 0.0
    %124 = vmatpush1.msra.mxu0 0.0
    %125 = vmatprep.subr.mxu0 0.0
    %126 = vmatpush1.msra.mxu0 0.0
    %127 = vmatprep.subr.mxu0 0.0
    %128 = vmatpush1.msra.mxu0 0.0
    %129 = vmatprep.subr.mxu0 0.0
    %130 = vmatpush1.msra.mxu0 0.0
    %131 = vmatprep.subr.mxu0 0.0
    %132 = vmatpush1.msra.mxu0 0.0
    %133 = vmatprep.subr.mxu0 0.0
    %134 = vmatpush1.msra.mxu0 0.0
    %135 = vmatprep.subr.mxu0 0.0
    %136 = vmatpush1.msra.mxu0 0.0
    %137 = vmatprep.subr.mxu0 0.0
    %138 = vmatpush1.msra.mxu0 0.0
    %139 = vmatprep.subr.mxu0 0.0
    %140 = vmatpush1.msra.mxu0 0.0
    %141 = vmatprep.subr.mxu0 0.0
    %142 = vmatpush1.msra.mxu0 0.0
    %143 = vmatprep.subr.mxu0 0.0
    %144 = vmatpush1.msra.mxu0 0.0
    %145 = vmatprep.subr.mxu0 0.0
    %146 = vmatpush1.msra.mxu0 0.0
    %147 = vmatprep.subr.mxu0 0.0
    %148 = vmatpush1.msra.mxu0 0.0
    %149 = vmatprep.subr.mxu0 0.0
    %150 = vmatpush1.msra.mxu0 0.0
    %151 = vmatprep.subr.mxu0 0.0
    %152 = vmatpush1.msra.mxu0 0.0
    %153 = vmatprep.subr.mxu0 0.0
    %154 = vmatpush1.msra.mxu0 0.0
    %155 = vmatprep.subr.mxu0 0.0
    %156 = vmatpush1.msra.mxu0 0.0
    %157 = vmatprep.subr.mxu0 0.0
    %158 = vmatpush1.msra.mxu0 0.0
    %159 = vmatprep.subr.mxu0 0.0
    %160 = vmatpush1.msra.mxu0 0.0
    %161 = vmatprep.subr.mxu0 0.0
    %162 = vmatpush1.msra.mxu0 0.0
    %163 = vmatprep.subr.mxu0 0.0
    %164 = vmatpush1.msra.mxu0 0.0
    %165 = vmatprep.subr.mxu0 0.0
    %166 = vmatpush1.msra.mxu0 0.0
    %167 = vmatprep.subr.mxu0 0.0
    %168 = vmatpush1.msra.mxu0 0.0
    %169 = vmatprep.subr.mxu0 0.0
    %170 = vmatpush1.msra.mxu0 0.0
    %171 = vmatprep.subr.mxu0 0.0
    %172 = vmatpush1.msra.mxu0 0.0
    %173 = vmatprep.mubr.f32.mxu0 0.0
    %174 = vmatmul.mubr.f32.gmra.mrb[0].mxu0 %v58
    %v175 = vpop.f32.mrb[0].mxu0
    %v176 = vadd.f32 %v54, %v175
    %v177 = vpop.f32.mrb[0].mxu0
    %178 = vmatprep.mubr.f32.mxu0 0.0
    %179 = vmatmul.mubr.f32.gmra.mrb[0].mxu0 %v61
    %v180 = vpop.f32.mrb[0].mxu0
    %v181 = vadd.f32 %v54, %v180
    %v182 = vpop.f32.mrb[0].mxu0
    %183 = vmatprep.mubr.f32.mxu0 0.0
    %184 = vmatmul.mubr.f32.gmra.mrb[0].mxu0 %v64
    %v185 = vpop.f32.mrb[0].mxu0
    %v186 = vadd.f32 %v54, %v185
    %v187 = vpop.f32.mrb[0].mxu0
    %188 = vmatprep.mubr.f32.mxu0 0.0
    %189 = vmatmul.mubr.f32.gmra.mrb[0].mxu0 %v67
    %v190 = vpop.f32.mrb[0].mxu0
    %v191 = vadd.f32 %v54, %v190
    %v192 = vpop.f32.mrb[0].mxu0
    %193 = vmatprep.mubr.f32.mxu0 0.0
    %194 = vmatmul.mubr.f32.gmra.mrb[0].mxu0 %v70
    %v195 = vpop.f32.mrb[0].mxu0
    %v196 = vadd.f32 %v54, %v195
    %v197 = vpop.f32.mrb[0].mxu0
    %198 = vmatprep.mubr.f32.mxu0 0.0
    %199 = vmatmul.mubr.f32.gmra.mrb[0].mxu0 %v73
    %v200 = vpop.f32.mrb[0].mxu0
    %v201 = vadd.f32 %v54, %v200
    %v202 = vpop.f32.mrb[0].mxu0
    %203 = vmatprep.mubr.f32.mxu0 0.0
    %204 = vmatmul.mubr.f32.gmra.mrb[0].mxu0 %v76
    %v205 = vpop.f32.mrb[0].mxu0
    %v206 = vadd.f32 %v54, %v205
    %v207 = vpop.f32.mrb[0].mxu0
    %208 = vmatprep.mubr.f32.mxu0 0.0
    %209 = vmatmul.mubr.f32.gmra.mrb[0].mxu0 %v79
    %v210 = vpop.f32.mrb[0].mxu0
    %v211 = vadd.f32 %v54, %v210
    %v212 = vpop.f32.mrb[0].mxu0
    %213 = vmatprep.mubr.f32.mxu0 0.0
    %214 = vmatmul.mubr.f32.gmra.mrb[0].mxu0 %v82
    %v215 = vpop.f32.mrb[0].mxu0
    %v216 = vadd.f32 %v54, %v215
    %v217 = vpop.f32.mrb[0].mxu0
    %218 = vmatprep.mubr.f32.mxu0 0.0
    %219 = vmatmul.mubr.f32.gmra.mrb[0].mxu0 %v85
    %v220 = vpop.f32.mrb[0].mxu0
    %v221 = vadd.f32 %v54, %v220
    %v222 = vpop.f32.mrb[0].mxu0
    %223 = vmatprep.mubr.f32.mxu0 0.0
    %224 = vmatmul.mubr.f32.gmra.mrb[0].mxu0 %v88
    %v225 = vpop.f32.mrb[0].mxu0
    %v226 = vadd.f32 %v54, %v225
    %v227 = vpop.f32.mrb[0].mxu0
    %228 = vmatprep.mubr.f32.mxu0 0.0
    %229 = vmatmul.mubr.f32.gmra.mrb[0].mxu0 %v91
    %v230 = vpop.f32.mrb[0].mxu0
    %v231 = vadd.f32 %v54, %v230
    %v232 = vpop.f32.mrb[0].mxu0
    %233 = vmatprep.mubr.f32.mxu0 0.0
    %234 = vmatmul.mubr.f32.gmra.mrb[0].mxu0 %v94
    %v235 = vpop.f32.mrb[0].mxu0
    %v236 = vadd.f32 %v54, %v235
    %v237 = vpop.f32.mrb[0].mxu0
    %238 = vmatprep.mubr.f32.mxu0 0.0
    %239 = vmatmul.mubr.f32.gmra.mrb[0].mxu0 %v97
    %v240 = vpop.f32.mrb[0].mxu0
    %v241 = vadd.f32 %v54, %v240
    %v242 = vpop.f32.mrb[0].mxu0
    %243 = vmatprep.mubr.f32.mxu0 0.0
    %244 = vmatmul.mubr.f32.gmra.mrb[0].mxu0 %v100
    %v245 = vpop.f32.mrb[0].mxu0
    %v246 = vadd.f32 %v54, %v245
    %v247 = vpop.f32.mrb[0].mxu0
    %248 = vmatprep.mubr.f32.mxu0 0.0
    %249 = vmatmul.mubr.f32.gmra.mrb[0].mxu0 %v103
    %v250 = vpop.f32.mrb[0].mxu0
    %v251 = vadd.f32 %v54, %v250
    %v252 = vpop.f32.mrb[0].mxu0
    %253 = vdwg.mxu0
    %v254 = vmax.f32 %v176, 0.0
    %v255 = vmax.f32 %v181, 0.0
    %v256 = vmax.f32 %v186, 0.0
    %v257 = vmax.f32 %v191, 0.0
    %v258 = vmax.f32 %v196, 0.0
    %v259 = vmax.f32 %v201, 0.0
    %v260 = vmax.f32 %v206, 0.0
    %v261 = vmax.f32 %v211, 0.0
    %v262 = vmax.f32 %v216, 0.0
    %v263 = vmax.f32 %v221, 0.0
    %v264 = vmax.f32 %v226, 0.0
    %v265 = vmax.f32 %v231, 0.0
    %v266 = vmax.f32 %v236, 0.0
    %v267 = vmax.f32 %v241, 0.0
    %v268 = vmax.f32 %v246, 0.0
    %v269 = vmax.f32 %v251, 0.0
    %v270 = vpack.c.bf16 %v255, %v254
    %v271 = vpack.c.bf16 %v257, %v256
    %v272 = vpack.c.bf16 %v259, %v258
    %v273 = vpack.c.bf16 %v261, %v260
    %v274 = vpack.c.bf16 %v263, %v262
    %v275 = vpack.c.bf16 %v265, %v264
    %v276 = vpack.c.bf16 %v267, %v266
    %v277 = vpack.c.bf16 %v269, %v268
    %v278 = vld [vmem:[%s3] sm:$0xf]
    %v279 = vld [vmem:[%s3 + $0x4] sm:$0xf]
    %v280 = vld [vmem:[%s3 + $0x8] sm:$0xf]
    %v281 = vld [vmem:[%s3 + $0xc] sm:$0xf]
    %v282 = vld [vmem:[%s3 + $0x10] sm:$0xf]
    %v283 = vld [vmem:[%s3 + $0x14] sm:$0xf]
    %v284 = vld [vmem:[%s3 + $0x18] sm:$0xf]
    %v285 = vld [vmem:[%s3 + $0x1c] sm:$0xf]
    %v286 = vld [vmem:[%s4] sm:$0x1]
    %v288 = vlaneseq
    %v289 = vshrl.u32 %v288, 7
    %v290 = vsub.s32 0, %v289
    %v291 = vrot.slane %v286, %v290
    %v301 = vunpack.c.l.b16 %v278
    %v302 = vunpack.c.l.b16 %v279
    %v303 = vunpack.c.l.b16 %v280
    %v304 = vunpack.c.l.b16 %v281
    %v305 = vunpack.c.l.b16 %v282
    %v306 = vunpack.c.l.b16 %v283
    %v307 = vunpack.c.l.b16 %v284
    %v308 = vunpack.c.l.b16 %v285
    %v309 = vpack.c.b16 %v302, %v301
    %v310 = vpack.c.b16 %v304, %v303
    %v311 = vpack.c.b16 %v306, %v305
    %v312 = vpack.c.b16 %v308, %v307
    %vm317 = vcmask 523264
    %v319 = vsel %vm317, %v270, 0
    %v322 = vsel %vm317, %v271, 0
    %v325 = vsel %vm317, %v272, 0
    %v328 = vsel %vm317, %v273, 0
    %v331 = vsel %vm317, %v274, 0
    %v334 = vsel %vm317, %v275, 0
    %v337 = vsel %vm317, %v276, 0
    %v340 = vsel %vm317, %v277, 0
    %342 = vmatprep.subr.bf16.mxu0 0
    %343 = vmatpush1.bf16.msra.mxu0 %v309
    %344 = vmatprep.subr.bf16.mxu0 0
    %345 = vmatpush1.bf16.msra.mxu0 %v310
    %346 = vmatprep.subr.bf16.mxu0 0
    %347 = vmatpush1.bf16.msra.mxu0 %v311
    %348 = vmatprep.subr.bf16.mxu0 0
    %349 = vmatpush1.bf16.msra.mxu0 %v312
    %350 = vmatprep.subr.bf16.mxu0 0
    %351 = vmatpush1.bf16.msra.mxu0 0
    %352 = vmatprep.subr.bf16.mxu0 0
    %353 = vmatpush1.bf16.msra.mxu0 0
    %354 = vmatprep.subr.bf16.mxu0 0
    %355 = vmatpush1.bf16.msra.mxu0 0
    %356 = vmatprep.subr.bf16.mxu0 0
    %357 = vmatpush1.bf16.msra.mxu0 0
    %358 = vmatprep.subr.bf16.mxu0 0
    %359 = vmatpush1.bf16.msra.mxu0 0
    %360 = vmatprep.subr.bf16.mxu0 0
    %361 = vmatpush1.bf16.msra.mxu0 0
    %362 = vmatprep.subr.bf16.mxu0 0
    %363 = vmatpush1.bf16.msra.mxu0 0
    %364 = vmatprep.subr.bf16.mxu0 0
    %365 = vmatpush1.bf16.msra.mxu0 0
    %366 = vmatprep.subr.bf16.mxu0 0
    %367 = vmatpush1.bf16.msra.mxu0 0
    %368 = vmatprep.subr.bf16.mxu0 0
    %369 = vmatpush1.bf16.msra.mxu0 0
    %370 = vmatprep.subr.bf16.mxu0 0
    %371 = vmatpush1.bf16.msra.mxu0 0
    %372 = vmatprep.subr.bf16.mxu0 0
    %373 = vmatpush1.bf16.msra.mxu0 0
    %374 = vmatprep.mubr.bf16.mxu0 0
    %375 = vmatmul.mubr.bf16.gmra.mrb[0].mxu0 %v319
    %v376 = vpop.f32.mrb[0].mxu0
    %v377 = vadd.f32 %v291, %v376
    %v378 = vpop.f32.mrb[0].mxu0
    %v379 = vpop.f32.mrb[0].mxu0
    %v380 = vadd.f32 %v291, %v379
    %v381 = vpop.f32.mrb[0].mxu0
    %382 = vmatprep.mubr.bf16.mxu0 0
    %383 = vmatmul.mubr.bf16.gmra.mrb[0].mxu0 %v322
    %v384 = vpop.f32.mrb[0].mxu0
    %v385 = vadd.f32 %v291, %v384
    %v386 = vpop.f32.mrb[0].mxu0
    %v387 = vpop.f32.mrb[0].mxu0
    %v388 = vadd.f32 %v291, %v387
    %v389 = vpop.f32.mrb[0].mxu0
    %390 = vmatprep.mubr.bf16.mxu0 0
    %391 = vmatmul.mubr.bf16.gmra.mrb[0].mxu0 %v325
    %v392 = vpop.f32.mrb[0].mxu0
    %v393 = vadd.f32 %v291, %v392
    %v394 = vpop.f32.mrb[0].mxu0
    %v395 = vpop.f32.mrb[0].mxu0
    %v396 = vadd.f32 %v291, %v395
    %v397 = vpop.f32.mrb[0].mxu0
    %398 = vmatprep.mubr.bf16.mxu0 0
    %399 = vmatmul.mubr.bf16.gmra.mrb[0].mxu0 %v328
    %v400 = vpop.f32.mrb[0].mxu0
    %v401 = vadd.f32 %v291, %v400
    %v402 = vpop.f32.mrb[0].mxu0
    %v403 = vpop.f32.mrb[0].mxu0
    %v404 = vadd.f32 %v291, %v403
    %v405 = vpop.f32.mrb[0].mxu0
    %406 = vmatprep.mubr.bf16.mxu0 0
    %407 = vmatmul.mubr.bf16.gmra.mrb[0].mxu0 %v331
    %v408 = vpop.f32.mrb[0].mxu0
    %v409 = vadd.f32 %v291, %v408
    %v410 = vpop.f32.mrb[0].mxu0
    %v411 = vpop.f32.mrb[0].mxu0
    %v412 = vadd.f32 %v291, %v411
    %v413 = vpop.f32.mrb[0].mxu0
    %414 = vmatprep.mubr.bf16.mxu0 0
    %415 = vmatmul.mubr.bf16.gmra.mrb[0].mxu0 %v334
    %v416 = vpop.f32.mrb[0].mxu0
    %v417 = vadd.f32 %v291, %v416
    %v418 = vpop.f32.mrb[0].mxu0
    %v419 = vpop.f32.mrb[0].mxu0
    %v420 = vadd.f32 %v291, %v419
    %v421 = vpop.f32.mrb[0].mxu0
    %422 = vmatprep.mubr.bf16.mxu0 0
    %423 = vmatmul.mubr.bf16.gmra.mrb[0].mxu0 %v337
    %v424 = vpop.f32.mrb[0].mxu0
    %v425 = vadd.f32 %v291, %v424
    %v426 = vpop.f32.mrb[0].mxu0
    %v427 = vpop.f32.mrb[0].mxu0
    %v428 = vadd.f32 %v291, %v427
    %v429 = vpop.f32.mrb[0].mxu0
    %430 = vmatprep.mubr.bf16.mxu0 0
    %431 = vmatmul.mubr.bf16.gmra.mrb[0].mxu0 %v340
    %v432 = vpop.f32.mrb[0].mxu0
    %v433 = vadd.f32 %v291, %v432
    %v434 = vpop.f32.mrb[0].mxu0
    %v435 = vpop.f32.mrb[0].mxu0
    %v436 = vadd.f32 %v291, %v435
    %v437 = vpop.f32.mrb[0].mxu0
    %438 = vdwg.mxu0
    %v439 = vmax.f32 %v377, 0.0
    %v440 = vmax.f32 %v380, 0.0
    %v441 = vmax.f32 %v385, 0.0
    %v442 = vmax.f32 %v388, 0.0
    %v443 = vmax.f32 %v393, 0.0
    %v444 = vmax.f32 %v396, 0.0
    %v445 = vmax.f32 %v401, 0.0
    %v446 = vmax.f32 %v404, 0.0
    %v447 = vmax.f32 %v409, 0.0
    %v448 = vmax.f32 %v412, 0.0
    %v449 = vmax.f32 %v417, 0.0
    %v450 = vmax.f32 %v420, 0.0
    %v451 = vmax.f32 %v425, 0.0
    %v452 = vmax.f32 %v428, 0.0
    %v453 = vmax.f32 %v433, 0.0
    %v454 = vmax.f32 %v436, 0.0
    %455 = vxpose.xlu0.b32.start [1/16] %v439, 128
    %456 = vxpose.xlu0.b32.cont [2/16] %v440, 128
    %457 = vxpose.xlu0.b32.cont [3/16] %v441, 128
    %458 = vxpose.xlu0.b32.cont [4/16] %v442, 128
    %459 = vxpose.xlu0.b32.cont [5/16] %v443, 128
    %460 = vxpose.xlu0.b32.cont [6/16] %v444, 128
    %461 = vxpose.xlu0.b32.cont [7/16] %v445, 128
    %462 = vxpose.xlu0.b32.cont [8/16] %v446, 128
    %463 = vxpose.xlu0.b32.cont [9/16] %v447, 128
    %464 = vxpose.xlu0.b32.cont [10/16] %v448, 128
    %465 = vxpose.xlu0.b32.cont [11/16] %v449, 128
    %466 = vxpose.xlu0.b32.cont [12/16] %v450, 128
    %467 = vxpose.xlu0.b32.cont [13/16] %v451, 128
    %468 = vxpose.xlu0.b32.cont [14/16] %v452, 128
    %469 = vxpose.xlu0.b32.cont [15/16] %v453, 128
    %470 = vxpose.xlu0.b32.end [16/16] %v454, 128
    %v471 = vpop.trf.xlu0
    %v472 = vpop.trf.xlu0
    %v473 = vpop.trf.xlu0
    %v474 = vpop.trf.xlu0
    %v475 = vpop.trf.xlu0
    %v476 = vpop.trf.xlu0
    %v477 = vpop.trf.xlu0
    %v478 = vpop.trf.xlu0
    %v479 = vpop.trf.xlu0
    %v480 = vpop.trf.xlu0
    %v481 = vpop.trf.xlu0
    %v482 = vpop.trf.xlu0
    %v483 = vpop.trf.xlu0
    %v484 = vpop.trf.xlu0
    %v485 = vpop.trf.xlu0
    %v486 = vpop.trf.xlu0
    %v487 = vpack.c.bf16 %v472, %v471
    %v488 = vpack.c.bf16 %v474, %v473
    %v489 = vpack.c.bf16 %v476, %v475
    %v490 = vpack.c.bf16 %v478, %v477
    %v491 = vld [vmem:[%s5] sm:$0xf]
    %v492 = vld [vmem:[%s6] sm:$0xff]
    %494 = vset.pattern.permute.xlu0 0
    %495 = vperm.xlu0 %494, %v492
    %v496 = vpop.permute.xlu0 %495
    %v499 = vsel %vm317, %v491, 0
    %501 = vmatprep.subr.bf16.mxu0 0
    %502 = vmatpush1.bf16.msra.mxu0 %v487
    %503 = vmatprep.subr.bf16.mxu0 0
    %504 = vmatpush1.bf16.msra.mxu0 %v488
    %505 = vmatprep.subr.bf16.mxu0 0
    %506 = vmatpush1.bf16.msra.mxu0 %v489
    %507 = vmatprep.subr.bf16.mxu0 0
    %508 = vmatpush1.bf16.msra.mxu0 %v490
    %509 = vmatprep.subr.bf16.mxu0 0
    %510 = vmatpush1.bf16.msra.mxu0 0
    %511 = vmatprep.subr.bf16.mxu0 0
    %512 = vmatpush1.bf16.msra.mxu0 0
    %513 = vmatprep.subr.bf16.mxu0 0
    %514 = vmatpush1.bf16.msra.mxu0 0
    %515 = vmatprep.subr.bf16.mxu0 0
    %516 = vmatpush1.bf16.msra.mxu0 0
    %517 = vmatprep.subr.bf16.mxu0 0
    %518 = vmatpush1.bf16.msra.mxu0 0
    %519 = vmatprep.subr.bf16.mxu0 0
    %520 = vmatpush1.bf16.msra.mxu0 0
    %521 = vmatprep.subr.bf16.mxu0 0
    %522 = vmatpush1.bf16.msra.mxu0 0
    %523 = vmatprep.subr.bf16.mxu0 0
    %524 = vmatpush1.bf16.msra.mxu0 0
    %525 = vmatprep.subr.bf16.mxu0 0
    %526 = vmatpush1.bf16.msra.mxu0 0
    %527 = vmatprep.subr.bf16.mxu0 0
    %528 = vmatpush1.bf16.msra.mxu0 0
    %529 = vmatprep.subr.bf16.mxu0 0
    %530 = vmatpush1.bf16.msra.mxu0 0
    %531 = vmatprep.subr.bf16.mxu0 0
    %532 = vmatpush1.bf16.msra.mxu0 0
    %533 = vmatprep.mubr.bf16.mxu0 0
    %534 = vmatmul.mubr.bf16.gmra.mrb[0].mxu0 %v499
    %v535 = vpop.f32.mrb[0].mxu0
    %v536 = vadd.f32 %v496, %v535
    %v537 = vpop.f32.mrb[0].mxu0
    %v538 = vpop.f32.mrb[0].mxu0
    %v539 = vpop.f32.mrb[0].mxu0
    %540 = vdwg.mxu0
    %541 = vst [vmem:[#allocation2] sm:$0xff] %v536
    %s542 = smul.u32 0, 128
    %v543 = vlaneseq
    %v544 = vshrl.u32 %v543, 7
    %v545 = vadd.s32 %v544, 8
    %v546 = vadd.s32 %v544, 16
    %v547 = vadd.s32 %v544, 24
    %v548 = vadd.s32 %v544, 32
    %v549 = vadd.s32 %v544, 40
    %v550 = vadd.s32 %v544, 48
    %v551 = vadd.s32 %v544, 56
    %v552 = vadd.s32 %v544, 64
    %v553 = vadd.s32 %v544, 72
    %v554 = vadd.s32 %v544, 80
    %v555 = vadd.s32 %v544, 88
    %v556 = vadd.s32 %v544, 96
    %v557 = vadd.s32 %v544, 104
    %v558 = vadd.s32 %v544, 112
    %v559 = vadd.s32 %v544, 120
    %v560 = vstv %s542
    %v561 = vadd.s32 %v560, %v544
    %v562 = vadd.s32 %v560, %v545
    %v563 = vadd.s32 %v560, %v546
    %v564 = vadd.s32 %v560, %v547
    %v565 = vadd.s32 %v560, %v548
    %v566 = vadd.s32 %v560, %v549
    %v567 = vadd.s32 %v560, %v550
    %v568 = vadd.s32 %v560, %v551
    %v569 = vadd.s32 %v560, %v552
    %v570 = vadd.s32 %v560, %v553
    %v571 = vadd.s32 %v560, %v554
    %v572 = vadd.s32 %v560, %v555
    %v573 = vadd.s32 %v560, %v556
    %v574 = vadd.s32 %v560, %v557
    %v575 = vadd.s32 %v560, %v558
    %v576 = vadd.s32 %v560, %v559
    %vm577 = vcmp.lt.s32.totalorder %v561, 2
    %vm578 = vcmp.lt.s32.totalorder %v562, 2
    %vm579 = vcmp.lt.s32.totalorder %v563, 2
    %vm580 = vcmp.lt.s32.totalorder %v564, 2
    %vm581 = vcmp.lt.s32.totalorder %v565, 2
    %vm582 = vcmp.lt.s32.totalorder %v566, 2
    %vm583 = vcmp.lt.s32.totalorder %v567, 2
    %vm584 = vcmp.lt.s32.totalorder %v568, 2
    %vm585 = vcmp.lt.s32.totalorder %v569, 2
    %vm586 = vcmp.lt.s32.totalorder %v570, 2
    %vm587 = vcmp.lt.s32.totalorder %v571, 2
    %vm588 = vcmp.lt.s32.totalorder %v572, 2
    %vm589 = vcmp.lt.s32.totalorder %v573, 2
    %vm590 = vcmp.lt.s32.totalorder %v574, 2
    %vm591 = vcmp.lt.s32.totalorder %v575, 2
    %vm592 = vcmp.lt.s32.totalorder %v576, 2
    %v593 = vsel %vm577, 1, 0
    %v594 = vsel %vm578, 1, 0
    %v595 = vsel %vm579, 1, 0
    %v596 = vsel %vm580, 1, 0
    %v597 = vsel %vm581, 1, 0
    %v598 = vsel %vm582, 1, 0
    %v599 = vsel %vm583, 1, 0
    %v600 = vsel %vm584, 1, 0
    %v601 = vsel %vm585, 1, 0
    %v602 = vsel %vm586, 1, 0
    %v603 = vsel %vm587, 1, 0
    %v604 = vsel %vm588, 1, 0
    %v605 = vsel %vm589, 1, 0
    %v606 = vsel %vm590, 1, 0
    %v607 = vsel %vm591, 1, 0
    %v608 = vsel %vm592, 1, 0
    %v609 = vcvt.s32.f32 %v593
    %v610 = vcvt.s32.f32 %v594
    %v611 = vcvt.s32.f32 %v595
    %v612 = vcvt.s32.f32 %v596
    %v613 = vcvt.s32.f32 %v597
    %v614 = vcvt.s32.f32 %v598
    %v615 = vcvt.s32.f32 %v599
    %v616 = vcvt.s32.f32 %v600
    %v617 = vcvt.s32.f32 %v601
    %v618 = vcvt.s32.f32 %v602
    %v619 = vcvt.s32.f32 %v603
    %v620 = vcvt.s32.f32 %v604
    %v621 = vcvt.s32.f32 %v605
    %v622 = vcvt.s32.f32 %v606
    %v623 = vcvt.s32.f32 %v607
    %v624 = vcvt.s32.f32 %v608
    %v625 = vmul.f32 %v31, %v609
    %v626 = vmul.f32 %v32, %v610
    %v627 = vmul.f32 %v33, %v611
    %v628 = vmul.f32 %v34, %v612
    %v629 = vmul.f32 %v35, %v613
    %v630 = vmul.f32 %v36, %v614
    %v631 = vmul.f32 %v37, %v615
    %v632 = vmul.f32 %v38, %v616
    %v633 = vmul.f32 %v39, %v617
    %v634 = vmul.f32 %v40, %v618
    %v635 = vmul.f32 %v41, %v619
    %v636 = vmul.f32 %v42, %v620
    %v637 = vmul.f32 %v43, %v621
    %v638 = vmul.f32 %v44, %v622
    %v639 = vmul.f32 %v45, %v623
    %v640 = vmul.f32 %v46, %v624
    %v641 = vlaneseq
    %v642 = vand.u32 %v641, 127
    %v643 = vadd.s32 %v560, %v642
    %vm644 = vcmp.lt.s32.totalorder %v643, 2
    %v645 = vsel %vm644, 1, 0
    %v646 = vcvt.s32.f32 %v645
    %v647 = vmul.f32 %v536, %v646
    %v648 = vsel %vm56, %v625, 0.0
    %v649 = vsel %vm56, %v626, 0.0
    %v650 = vadd.f32 %v648, %v649
    %v651 = vsel %vm56, %v627, 0.0
    %v652 = vadd.f32 %v650, %v651
    %v653 = vsel %vm56, %v628, 0.0
    %v654 = vadd.f32 %v652, %v653
    %v655 = vsel %vm56, %v629, 0.0
    %v656 = vadd.f32 %v654, %v655
    %v657 = vsel %vm56, %v630, 0.0
    %v658 = vadd.f32 %v656, %v657
    %v659 = vsel %vm56, %v631, 0.0
    %v660 = vadd.f32 %v658, %v659
    %v661 = vsel %vm56, %v632, 0.0
    %v662 = vadd.f32 %v660, %v661
    %v663 = vsel %vm56, %v633, 0.0
    %v664 = vadd.f32 %v662, %v663
    %v665 = vsel %vm56, %v634, 0.0
    %v666 = vadd.f32 %v664, %v665
    %v667 = vsel %vm56, %v635, 0.0
    %v668 = vadd.f32 %v666, %v667
    %v669 = vsel %vm56, %v636, 0.0
    %v670 = vadd.f32 %v668, %v669
    %v671 = vsel %vm56, %v637, 0.0
    %v672 = vadd.f32 %v670, %v671
    %v673 = vsel %vm56, %v638, 0.0
    %v674 = vadd.f32 %v672, %v673
    %v675 = vsel %vm56, %v639, 0.0
    %v676 = vadd.f32 %v674, %v675
    %v677 = vsel %vm56, %v640, 0.0
    %v678 = vadd.f32 %v676, %v677
    %679 = vadd.xlane.f32.xlu0 %v678
    %v680 = vpop.xlane.xlu0 %679
    %v681 = vrot.slane %v680, 4
    %v682 = vadd.f32 %v680, %v681
    %v683 = vrot.slane %v682, 2
    %v684 = vadd.f32 %v682, %v683
    %v685 = vrot.slane %v684, 1
    %v686 = vadd.f32 %v684, %v685
    %s687 = vtos %v686
    %v688 = vmul.f32 %v625, %v625
    %v689 = vmul.f32 %v626, %v626
    %v690 = vmul.f32 %v627, %v627
    %v691 = vmul.f32 %v628, %v628
    %v692 = vmul.f32 %v629, %v629
    %v693 = vmul.f32 %v630, %v630
    %v694 = vmul.f32 %v631, %v631
    %v695 = vmul.f32 %v632, %v632
    %v696 = vmul.f32 %v633, %v633
    %v697 = vmul.f32 %v634, %v634
    %v698 = vmul.f32 %v635, %v635
    %v699 = vmul.f32 %v636, %v636
    %v700 = vmul.f32 %v637, %v637
    %v701 = vmul.f32 %v638, %v638
    %v702 = vmul.f32 %v639, %v639
    %v703 = vmul.f32 %v640, %v640
    %v704 = vsel %vm56, %v688, 0.0
    %v705 = vsel %vm56, %v689, 0.0
    %v706 = vadd.f32 %v704, %v705
    %v707 = vsel %vm56, %v690, 0.0
    %v708 = vadd.f32 %v706, %v707
    %v709 = vsel %vm56, %v691, 0.0
    %v710 = vadd.f32 %v708, %v709
    %v711 = vsel %vm56, %v692, 0.0
    %v712 = vadd.f32 %v710, %v711
    %v713 = vsel %vm56, %v693, 0.0
    %v714 = vadd.f32 %v712, %v713
    %v715 = vsel %vm56, %v694, 0.0
    %v716 = vadd.f32 %v714, %v715
    %v717 = vsel %vm56, %v695, 0.0
    %v718 = vadd.f32 %v716, %v717
    %v719 = vsel %vm56, %v696, 0.0
    %v720 = vadd.f32 %v718, %v719
    %v721 = vsel %vm56, %v697, 0.0
    %v722 = vadd.f32 %v720, %v721
    %v723 = vsel %vm56, %v698, 0.0
    %v724 = vadd.f32 %v722, %v723
    %v725 = vsel %vm56, %v699, 0.0
    %v726 = vadd.f32 %v724, %v725
    %v727 = vsel %vm56, %v700, 0.0
    %v728 = vadd.f32 %v726, %v727
    %v729 = vsel %vm56, %v701, 0.0
    %v730 = vadd.f32 %v728, %v729
    %v731 = vsel %vm56, %v702, 0.0
    %v732 = vadd.f32 %v730, %v731
    %v733 = vsel %vm56, %v703, 0.0
    %v734 = vadd.f32 %v732, %v733
    %735 = vadd.xlane.f32.xlu0 %v734
    %v736 = vpop.xlane.xlu0 %735
    %v737 = vrot.slane %v736, 4
    %v738 = vadd.f32 %v736, %v737
    %v739 = vrot.slane %v738, 2
    %v740 = vadd.f32 %v738, %v739
    %v741 = vrot.slane %v740, 1
    %v742 = vadd.f32 %v740, %v741
    %s743 = vtos %v742
    %v744 = vmul.f32 %v647, %v647
    %745 = vadd.xlane.f32.xlu0 %v744
    %v746 = vpop.xlane.xlu0 %745
    %v747 = vrot.slane %v746, 4
    %v748 = vadd.f32 %v746, %v747
    %v749 = vrot.slane %v748, 2
    %v750 = vadd.f32 %v748, %v749
    %v751 = vrot.slane %v750, 1
    %v752 = vadd.f32 %v750, %v751
    %s753 = vtos %v752
    %vm754 = vcmp.eq.s32.totalorder %v642, 0
    %vm755 = vcmp.eq.s32.totalorder %v642, 1
    %vm756 = vcmp.eq.s32.totalorder %v642, 2
    %v757 = vstv %s753
    %v758 = vsel %vm756, %v757, 0.0
    %v759 = vstv %s743
    %v760 = vsel %vm755, %v759, %v758
    %v761 = vstv %s687
    %v762 = vsel %vm754, %v761, %v760
    %763 = vst [vmem:[#allocation4] sm:$0xff] %v762
    // Predicated region
    $region30: #{tpu_custom_call.1} parent=1 // pred_check
      _
    $region31: #{tpu_custom_call.1} parent=1 // pred_check_branch
      %765 = sbr.rel (0) target = $region33
    $region32: #{tpu_custom_call.1} parent=1 // pred_region
      %s767 = ssub.s32 128, 128
      %768 = vsyncadd [#allocation3], %s767
      %s770 = sshll.u32 [#allocation2], 4
      %s771 = int_to_ptr.vmem [resolvable:$true] %s770
      %773 = dma.vmem_to_hbm [thread:$0]  %s771, 128, %s7, [#allocation3]
    $region33: #{tpu_custom_call.1} parent=1 // pred_fallthru
      _
    // Predicated region
    $region34: #{tpu_custom_call.1} parent=1 // pred_check
      _
    $region35: #{tpu_custom_call.1} parent=1 // pred_check_branch
      %775 = sbr.rel (0) target = $region37
    $region36: #{tpu_custom_call.1} parent=1 // pred_region
      %s777 = ssub.s32 128, 128
      %778 = vsyncadd [#allocation5], %s777
      %s780 = sshll.u32 [#allocation4], 4
      %s781 = int_to_ptr.vmem [resolvable:$true] %s780
      %783 = dma.vmem_to_hbm [thread:$0]  %s781, 128, %s8, [#allocation5]
    $region37: #{tpu_custom_call.1} parent=1 // pred_fallthru
      _
    // Predicated region
    $region38: #{tpu_custom_call.1} parent=1 // pred_check
      _
    $region39: #{tpu_custom_call.1} parent=1 // pred_check_branch
      %785 = sbr.rel (0) target = $region41
    $region40: #{tpu_custom_call.1} parent=1 // pred_region
      %786 = dma.done [#allocation3], 128
    $region41: #{tpu_custom_call.1} parent=1 // pred_fallthru
      _
    // Predicated region
    $region42: #{tpu_custom_call.1} parent=1 // pred_check
      _
    $region43: #{tpu_custom_call.1} parent=1 // pred_check_branch
      %788 = sbr.rel (0) target = $region45
    $region44: #{tpu_custom_call.1} parent=1 // pred_region
      %789 = dma.done [#allocation5], 128
    $region45: #{tpu_custom_call.1} parent=1 // pred_fallthru
      _
    %790 = vsyncpa [#allocation3], 1
    %791 = vsyncpa [#allocation5], 1

</llo_original>
